<compile_context>
chip_gen: v7x
topology: tpu7x:2x2x1
jax: 0.10.0
libtpu: 0.0.40
codegen_flags: <defaults>
</compile_context>

<pallas_src>
import jax
import jax.numpy as jnp
from jax.experimental import pallas as pl
from jax.experimental.pallas import tpu as pltpu


def bpnn_kernel(x_ref, w_ref, b_ref, o_ref):
    # Single fused GEMM + bias add on the current batch tile.
    # x_ref: [TILE_B, 50], w_ref: [50, 2], b_ref: [1, 2], o_ref: [TILE_B, 2]
    y = jnp.dot(x_ref[...], w_ref[...], preferred_element_type=jnp.float32)
    o_ref[...] = (y + b_ref[...]).astype(o_ref.dtype)


def bpnn_forward(x, w1, b1, w2, b2, *, tile_b=2048):
    """Forward pass of BPNN.

    x:  [B, 50]  float32 (PyTorch nn.Linear input layout)
    w1: [25, 50], b1: [25], w2: [2, 25], b2: [2]  (PyTorch parameter layout)
    tile_b: batch tile size (multiple of 8); large B is pipelined over a grid.
    """
    B, F_in = x.shape
    assert F_in == 50, f"expected 50 input features, got {F_in}"

    # --- Algebraic fusion of the two Linears (done once, outside the kernel) ---
    # (x @ w1.T + b1) @ w2.T + b2  ==  x @ (w1.T @ w2.T) + (b1 @ w2.T + b2)
    w_fused = jnp.transpose(w1) @ jnp.transpose(w2)          # [50, 2]
    b_fused = (b1 @ jnp.transpose(w2) + b2).reshape(1, -1)   # [1, 2]

    # --- Batch tiling: single block for small B, pipelined grid for large B ---
    if B <= tile_b:
        tb = B                      # block == full array dims (always legal)
    else:
        tb = tile_b                 # multiple of 8; last block masked by Pallas
    grid = (pl.cdiv(B, tb),)

    return pl.pallas_call(
        bpnn_kernel,
        out_shape=jax.ShapeDtypeStruct((B, 2), x.dtype),
        grid_spec=pltpu.PrefetchScalarGridSpec(
            num_scalar_prefetch=0,
            grid=grid,
            in_specs=[
                pl.BlockSpec((tb, 50), lambda i: (i, 0)),   # x: tiled over batch
                pl.BlockSpec((50, 2), lambda i: (0, 0)),    # fused weight: resident
                pl.BlockSpec((1, 2), lambda i: (0, 0)),     # fused bias: resident
            ],
            out_specs=pl.BlockSpec((tb, 2), lambda i: (i, 0)),
        ),
        compiler_params=pltpu.CompilerParams(
            dimension_semantics=("parallel",),              # megacore on v7x
        ),
    )(x, w_fused, b_fused)


def init_params(key):
    """Deterministic synthetic parameters matching BPNN.__init__ shapes."""
    k1, k2, k3, k4 = jax.random.split(key, 4)
    # PyTorch default nn.Linear init: U(-1/sqrt(fan_in), 1/sqrt(fan_in))
    lim1 = 1.0 / jnp.sqrt(50.0)
    lim2 = 1.0 / jnp.sqrt(25.0)
    w1 = jax.random.uniform(k1, (25, 50), jnp.float32, -lim1, lim1)
    b1 = jax.random.uniform(k2, (25,),    jnp.float32, -lim1, lim1)
    w2 = jax.random.uniform(k3, (2, 25),  jnp.float32, -lim2, lim2)
    b2 = jax.random.uniform(k4, (2,),     jnp.float32, -lim2, lim2)
    return w1, b1, w2, b2


def _reference(x, w1, b1, w2, b2):
    # Plain-JAX reference with identical semantics to the PyTorch module.
    return (x @ w1.T + b1) @ w2.T + b2


if __name__ == "__main__":
    key = jax.random.PRNGKey(0)
    kx, kp, kx2 = jax.random.split(key, 3)
    w1, b1, w2, b2 = init_params(kp)

    # Small canonical case (single block).
    B = 8
    x = jax.random.normal(kx, (B, 50), jnp.float32)
    out = bpnn_forward(x, w1, b1, w2, b2)
    out = jax.block_until_ready(out)
    ref = _reference(x, w1, b1, w2, b2)
    assert out.shape == (B, 2)
    assert jnp.allclose(out, ref, atol=1e-5, rtol=1e-5)

    # Ragged batch case to exercise the grid + masked partial last block.
    B2 = 300
    x2 = jax.random.normal(kx2, (B2, 50), jnp.float32)
    out2 = bpnn_forward(x2, w1, b1, w2, b2, tile_b=128)
    out2 = jax.block_until_ready(out2)
    ref2 = _reference(x2, w1, b1, w2, b2)
    assert out2.shape == (B2, 2)
    assert jnp.allclose(out2, ref2, atol=1e-5, rtol=1e-5)

    print("KERNEL_OK")
</pallas_src>

<mosaic_0001>
module attributes {stable_mosaic.version = 11 : i64} {
  func.func @bpnn_kernel(%arg0: i32, %arg1: memref<8x50xf32, #tpu.memory_space<vmem>>, %arg2: memref<50x2xf32, #tpu.memory_space<vmem>>, %arg3: memref<1x2xf32, #tpu.memory_space<vmem>>, %arg4: memref<8x2xf32, #tpu.memory_space<vmem>>) attributes {dimension_semantics = [#tpu.dimension_semantics<parallel>], iteration_bounds = array<i64: 1>, scalar_prefetch = 0 : i64, scratch_operands = 0 : i64, tpu.core_type = #tpu.core_type<tc>, window_params = [{transform_indices = @transform_0, window_bounds = array<i64: 8, 50>}, {pipeline_mode = #tpu.pipeline_mode<synchronous>, transform_indices = @transform_1, window_bounds = array<i64: 50, 2>}, {pipeline_mode = #tpu.pipeline_mode<synchronous>, transform_indices = @transform_2, window_bounds = array<i64: 1, 2>}, {transform_indices = @transform_3, window_bounds = array<i64: 8, 2>}]} {
    %c0 = arith.constant 0 : index
    %c0_0 = arith.constant 0 : index
    %0 = vector.load %arg1[%c0, %c0_0] : memref<8x50xf32, #tpu.memory_space<vmem>>, vector<8x50xf32>
    %c0_1 = arith.constant 0 : index
    %c0_2 = arith.constant 0 : index
    %1 = vector.load %arg2[%c0_1, %c0_2] : memref<50x2xf32, #tpu.memory_space<vmem>>, vector<50x2xf32>
    %cst = arith.constant dense<0.000000e+00> : vector<8x2xf32>
    %2 = tpu.matmul %0, %1, %cst {dimension_numbers = #tpu.dot_dimension_numbers<[1], [0], [0], [1], [0, 0, 1, 1], [], []>} : vector<8x50xf32>, vector<50x2xf32>, vector<8x2xf32> -> vector<8x2xf32>
    %c0_3 = arith.constant 0 : index
    %c0_4 = arith.constant 0 : index
    %3 = vector.load %arg3[%c0_3, %c0_4] : memref<1x2xf32, #tpu.memory_space<vmem>>, vector<1x2xf32>
    %4 = vector.broadcast %3 : vector<1x2xf32> to vector<8x2xf32>
    %5 = arith.addf %2, %4 : vector<8x2xf32>
    %c0_5 = arith.constant 0 : index
    %c0_6 = arith.constant 0 : index
    %6 = vector.load %arg4[%c0_5, %c0_6] : memref<8x2xf32, #tpu.memory_space<vmem>>, vector<8x2xf32>
    tpu.vector_store %arg4[%c0_5, %c0_6], %5 {strides = array<i32>} : memref<8x2xf32, #tpu.memory_space<vmem>>, vector<8x2xf32>,
    return
  }
  func.func @transform_0(%arg0: i32) -> (i32, i32) {
    %c0_i32 = arith.constant 0 : i32
    %c0_i32_0 = arith.constant 0 : i32
    return %arg0, %c0_i32 : i32, i32
  }
  func.func @transform_1(%arg0: i32) -> (i32, i32) {
    %c0_i32 = arith.constant 0 : i32
    %c0_i32_0 = arith.constant 0 : i32
    %c0_i32_1 = arith.constant 0 : i32
    return %c0_i32, %c0_i32_0 : i32, i32
  }
  func.func @transform_2(%arg0: i32) -> (i32, i32) {
    %c0_i32 = arith.constant 0 : i32
    %c0_i32_0 = arith.constant 0 : i32
    %c0_i32_1 = arith.constant 0 : i32
    return %c0_i32, %c0_i32_0 : i32, i32
  }
  func.func @transform_3(%arg0: i32) -> (i32, i32) {
    %c0_i32 = arith.constant 0 : i32
    %c0_i32_0 = arith.constant 0 : i32
    return %arg0, %c0_i32 : i32, i32
  }
}

</mosaic_0001>

<llo_original>
// kernel: tpu_custom_call.1
$region0: #{tpu_custom_call.1}
  #allocation0 [shape = 'u32[]', space=smem, size = 0x4, offset = 0x4, fixed_abs, tag = 'smem constant byte address 0x4 - core index']
  #allocation1 [shape = 'u32[144,128]{1,0:T(1,128)}', space=vmem, size = 0x12000, scoped, tag = 'internal scratch']
  %s0 = inlined_call_operand.vmem [shape: f32[8,50], index: 0, kind: input, shape index: {}]
  %s1 = inlined_call_operand.vmem [shape: f32[50,2], index: 1, kind: input, shape index: {}]
  %s2 = inlined_call_operand.vmem [shape: f32[1,2], index: 2, kind: input, shape index: {}]
  %s3 = inlined_call_operand.vmem [shape: f32[8,2], index: 3, kind: output, shape index: {}]
  %s4 = sld [smem:[#allocation0]]
  $region22: #{tpu_custom_call.1} parent=0
    _
  %s6 = ssub.s32 1, %s4
  %s7 = scalar_select 0, %s6, %s4
  // Predicated region
  $region2: #{tpu_custom_call.1} parent=0 // pred_check
    _
  $region3: #{tpu_custom_call.1} parent=0 // pred_check_branch
    %9 = sbr.rel (0) target = $region5
  $region4: #{tpu_custom_call.1} parent=0 // pred_region
    _
  $region5: #{tpu_custom_call.1} parent=0 // pred_fallthru
    _
  // Predicated region
  $region6: #{tpu_custom_call.1} parent=0 // pred_check
    _
  $region7: #{tpu_custom_call.1} parent=0 // pred_check_branch
    %11 = sbr.rel (0) target = $region9
  $region8: #{tpu_custom_call.1} parent=0 // pred_region
    _
  $region9: #{tpu_custom_call.1} parent=0 // pred_fallthru
    _
  // Predicated region
  $region10: #{tpu_custom_call.1} parent=0 // pred_check
    _
  $region11: #{tpu_custom_call.1} parent=0 // pred_check_branch
    %13 = sbr.rel (0) target = $region13
  $region12: #{tpu_custom_call.1} parent=0 // pred_region
    _
  $region13: #{tpu_custom_call.1} parent=0 // pred_fallthru
    _
  %v14 = vld [vmem:[%s0] sm:$0xff]
  %v15 = vld [vmem:[%s1] sm:$0xff]
  %v16 = vld [vmem:[%s1 + $0x8] sm:$0xff]
  %v17 = vld [vmem:[%s1 + $0x10] sm:$0xff]
  %v18 = vld [vmem:[%s1 + $0x18] sm:$0xff]
  %v19 = vld [vmem:[%s1 + $0x20] sm:$0xff]
  %v20 = vld [vmem:[%s1 + $0x28] sm:$0xff]
  %v21 = vld [vmem:[%s1 + $0x30] sm:$0x3]
  %v22 = vld [vmem:[%s2] sm:$0x1]
  %v24 = vlaneseq
  %v25 = vshrl.u32 %v24, 7
  %v26 = vsub.s32 0, %v25
  %v27 = vrot.slane %v22, %v26
  %vm29 = vcmask 408576
  %v31 = vsel %vm29, %v14, 0
  %vm33 = vcmask 1041408
  %v35 = vsel %vm33, %v21, 0
  %37 = vmatprep.subr.mxu0 0.0
  %38 = vmatpush1.msra.mxu0 %v15
  %39 = vmatprep.subr.mxu0 0.0
  %40 = vmatpush1.msra.mxu0 %v16
  %41 = vmatprep.subr.mxu0 0.0
  %42 = vmatpush1.msra.mxu0 %v17
  %43 = vmatprep.subr.mxu0 0.0
  %44 = vmatpush1.msra.mxu0 %v18
  %45 = vmatprep.subr.mxu0 0.0
  %46 = vmatpush1.msra.mxu0 %v19
  %47 = vmatprep.subr.mxu0 0.0
  %48 = vmatpush1.msra.mxu0 %v20
  %49 = vmatprep.subr.mxu0 0.0
  %50 = vmatpush1.msra.mxu0 %v35
  %51 = vmatprep.subr.mxu0 0.0
  %52 = vmatpush1.msra.mxu0 0.0
  %53 = vmatprep.subr.mxu0 0.0
  %54 = vmatpush1.msra.mxu0 0.0
  %55 = vmatprep.subr.mxu0 0.0
  %56 = vmatpush1.msra.mxu0 0.0
  %57 = vmatprep.subr.mxu0 0.0
  %58 = vmatpush1.msra.mxu0 0.0
  %59 = vmatprep.subr.mxu0 0.0
  %60 = vmatpush1.msra.mxu0 0.0
  %61 = vmatprep.subr.mxu0 0.0
  %62 = vmatpush1.msra.mxu0 0.0
  %63 = vmatprep.subr.mxu0 0.0
  %64 = vmatpush1.msra.mxu0 0.0
  %65 = vmatprep.subr.mxu0 0.0
  %66 = vmatpush1.msra.mxu0 0.0
  %67 = vmatprep.subr.mxu0 0.0
  %68 = vmatpush1.msra.mxu0 0.0
  %69 = vmatprep.subr.mxu0 0.0
  %70 = vmatpush1.msra.mxu0 0.0
  %71 = vmatprep.subr.mxu0 0.0
  %72 = vmatpush1.msra.mxu0 0.0
  %73 = vmatprep.subr.mxu0 0.0
  %74 = vmatpush1.msra.mxu0 0.0
  %75 = vmatprep.subr.mxu0 0.0
  %76 = vmatpush1.msra.mxu0 0.0
  %77 = vmatprep.subr.mxu0 0.0
  %78 = vmatpush1.msra.mxu0 0.0
  %79 = vmatprep.subr.mxu0 0.0
  %80 = vmatpush1.msra.mxu0 0.0
  %81 = vmatprep.subr.mxu0 0.0
  %82 = vmatpush1.msra.mxu0 0.0
  %83 = vmatprep.subr.mxu0 0.0
  %84 = vmatpush1.msra.mxu0 0.0
  %85 = vmatprep.subr.mxu0 0.0
  %86 = vmatpush1.msra.mxu0 0.0
  %87 = vmatprep.subr.mxu0 0.0
  %88 = vmatpush1.msra.mxu0 0.0
  %89 = vmatprep.subr.mxu0 0.0
  %90 = vmatpush1.msra.mxu0 0.0
  %91 = vmatprep.subr.mxu0 0.0
  %92 = vmatpush1.msra.mxu0 0.0
  %93 = vmatprep.subr.mxu0 0.0
  %94 = vmatpush1.msra.mxu0 0.0
  %95 = vmatprep.subr.mxu0 0.0
  %96 = vmatpush1.msra.mxu0 0.0
  %97 = vmatprep.subr.mxu0 0.0
  %98 = vmatpush1.msra.mxu0 0.0
  %99 = vmatprep.subr.mxu0 0.0
  %100 = vmatpush1.msra.mxu0 0.0
  %101 = vmatprep.mubr.f32.mxu0 0.0
  %102 = vmatmul.mubr.f32.gmra.mrb[0].mxu0 %v31
  %v103 = vpop.f32.mrb[0].mxu0
  %v104 = vadd.f32 %v27, %v103
  %v105 = vpop.f32.mrb[0].mxu0
  %106 = vdwg.mxu0
  %vm107 = vcmask 15360
  %108 = vst.msk [vmem:[%s3] sm:$0xff] %vm107, %v104
  // Predicated region
  $region14: #{tpu_custom_call.1} parent=0 // pred_check
    _
  $region15: #{tpu_custom_call.1} parent=0 // pred_check_branch
    %110 = sbr.rel (0) target = $region17
  $region16: #{tpu_custom_call.1} parent=0 // pred_region
    _
  $region17: #{tpu_custom_call.1} parent=0 // pred_fallthru
    _
  // Predicated region
  $region18: #{tpu_custom_call.1} parent=0 // pred_check
    _
  $region19: #{tpu_custom_call.1} parent=0 // pred_check_branch
    %112 = sbr.rel (0) target = $region21
  $region20: #{tpu_custom_call.1} parent=0 // pred_region
    _
  $region21: #{tpu_custom_call.1} parent=0 // pred_fallthru
    _

</llo_original>
